<compile_context>
chip_gen: v5e
topology: v5e:2x2
jax: 0.10.0
libtpu: 0.0.40
codegen_flags: <defaults>
</compile_context>

<pallas_src>
import numpy as np
import jax
import jax.numpy as jnp
from jax import lax
from jax.experimental import pallas as pl
from jax.experimental.pallas import tpu as pltpu


def _round_up(x: int, m: int) -> int:
    return ((x + m - 1) // m) * m


def _features_linear_kernel(idx_ref, table_ref, bias_ref, out_ref):
    """One batch tile, batch mapped to the 128-lane axis.

    idx_ref:   (num_fields, block_b) int32, VMEM; offsets folded + clamped.
    table_ref: (V, D) float32, VMEM; grid-invariant (resident).
    bias_ref:  (D, 1) float32, VMEM; grid-invariant.
    out_ref:   (D, block_b) float32 lane-dense output block.
    """
    vocab, out_dim = table_ref.shape

    idx = idx_ref[...]                                       # (F, TB) int32, full-width vregs

    # TODO(synk): this compare-select gather is O(V) vector work per tile; for
    # large vocabularies (table near the VMEM budget) switch to a real gather
    # (per-row DMA / scalar-core gather) and tile the table over V.
    for d in range(out_dim):                                 # static; typically D == 1
        def body(v, acc):
            val = table_ref[pl.ds(v, 1), pl.ds(d, 1)]        # (1, 1) table value, dynamic row
            return acc + jnp.where(idx == v, val, jnp.float32(0.0))   # (F, TB) VPU select+add

        acc = lax.fori_loop(0, vocab, body,
                            jnp.zeros(idx.shape, jnp.float32))         # (F, TB)
        out_ref[pl.ds(d, 1), :] = (
            jnp.sum(acc, axis=0, keepdims=True)              # one sublane (XLU) reduce
            + bias_ref[pl.ds(d, 1), :]                       # (1, 1) broadcast over lanes
        )


def features_linear(x_idx, table, bias, offsets, *, block_b: int = 1024):
    """x_idx: (B, F) int; table: (V, D) f32; bias: (D,) f32; offsets: (F,) int."""
    B, F = x_idx.shape
    V, D = table.shape
    assert offsets.shape[-1] == F
    assert V < 2**31 - 1, "sum(field_dims) must fit in int32"

    # Lane-dense batch tiling: block_b is a multiple of 128.
    block_b = max(128, _round_up(min(block_b, _round_up(B, 128)), 128))
    b_pad = _round_up(B, block_b)
    num_tiles = b_pad // block_b

    # Fold offsets and clamp once in the wrapper (vectorized by XLA), cast to
    # int32, put batch on the lane axis, pad the batch to the tile size.
    shifted = x_idx.astype(jnp.int32) + offsets.astype(jnp.int32)[None, :]
    shifted = jnp.clip(shifted, 0, V - 1)
    idx_fb = shifted.T                                       # (F, B), batch on lanes
    if b_pad != B:
        idx_fb = jnp.pad(idx_fb, ((0, 0), (0, b_pad - B)))   # padded rows gather index 0, sliced off

    table_f32 = table.astype(jnp.float32)
    bias_col = bias.reshape(D, 1).astype(jnp.float32)        # (D, 1)

    # Generation-aware VMEM budget (v7x: 64 MiB/TC, v5e/v6e: 128 MiB).
    try:
        vmem_cap = int(pltpu.get_tpu_info().vmem_capacity_bytes)
    except Exception:
        vmem_cap = 64 << 20
    vmem_needed = (4 * (V * D + D)                           # resident table + bias
                   + 2 * 4 * block_b * (F + D)               # double-buffered idx + out blocks
                   + (1 << 20))
    vmem_limit = int(min(max(vmem_needed, 16 << 20), vmem_cap // 2))

    cost = pl.CostEstimate(
        flops=int(3 * b_pad * V * F * D + b_pad * D),
        transcendentals=0,
        bytes_accessed=int(4 * (V * D + F * b_pad + D * b_pad + D)),
    )

    def run(single_buffer_resident: bool):
        resident = {"pipeline_mode": pl.Buffered(1)} if single_buffer_resident else {}
        grid_spec = pltpu.PrefetchScalarGridSpec(
            num_scalar_prefetch=0,
            grid=(num_tiles,),
            in_specs=[
                pl.BlockSpec((F, block_b), lambda i: (0, i)),           # indices, per-tile DMA
                pl.BlockSpec((V, D), lambda i: (0, 0), **resident),     # table, resident in VMEM
                pl.BlockSpec((D, 1), lambda i: (0, 0), **resident),     # bias, resident
            ],
            out_specs=pl.BlockSpec((D, block_b), lambda i: (0, i)),     # lane-dense output
        )
        return pl.pallas_call(
            _features_linear_kernel,
            out_shape=jax.ShapeDtypeStruct((D, b_pad), jnp.float32),
            grid_spec=grid_spec,
            compiler_params=pltpu.CompilerParams(
                dimension_semantics=("parallel",),
                vmem_limit_bytes=vmem_limit,
            ),
            cost_estimate=cost,
        )(idx_fb, table_f32, bias_col)

    try:
        out_t = run(True)
    except Exception:
        # Fallback for jax versions without BlockSpec.pipeline_mode / Buffered(1):
        # default double-buffering of the (tiny) resident table is still correct.
        out_t = run(False)

    out = out_t[:, :B] if b_pad != B else out_t
    return jnp.transpose(out)                                # (B, D)


if __name__ == "__main__":
    # Module config (synthetic, deterministic).
    field_dims = np.array([11, 7, 5, 13, 9], dtype=np.int64)   # vocab = 45
    output_dim = 1
    vocab = int(field_dims.sum())
    num_fields = len(field_dims)
    batch = 512                                                # two 256-row batch tiles below

    offsets_np = np.array((0, *np.cumsum(field_dims)[:-1]), dtype=np.int32)

    key = jax.random.PRNGKey(0)
    k_emb, k_bias, k_idx = jax.random.split(key, 3)

    # nn.Embedding default init ~ N(0, 1); bias is a trainable parameter
    # (initialized to zeros in the module) -- use a nonzero value to exercise it.
    table = jax.random.normal(k_emb, (vocab, output_dim), dtype=jnp.float32)
    bias = 0.1 * jax.random.normal(k_bias, (output_dim,), dtype=jnp.float32)

    # Per-field indices in [0, field_dims[f]).
    keys = jax.random.split(k_idx, num_fields)
    idx_cols = [
        jax.random.randint(keys[f], (batch, 1), 0, int(field_dims[f]), dtype=jnp.int32)
        for f in range(num_fields)
    ]
    x_idx = jnp.concatenate(idx_cols, axis=1)                  # (batch, num_fields) int32

    offsets = jnp.asarray(offsets_np, dtype=jnp.int32)

    # block_b=256 -> num_tiles=2, exercising the parallel batch-tile grid axis.
    out = features_linear(x_idx, table, bias, offsets, block_b=256)
    out = jax.block_until_ready(out)

    # Pure-JAX reference of the PyTorch forward.
    shifted = x_idx + offsets[None, :]
    ref = jnp.take(table, shifted, axis=0).sum(axis=1) + bias[None, :]
    ref = jax.block_until_ready(ref)

    assert out.shape == (batch, output_dim)
    assert np.allclose(np.asarray(out), np.asarray(ref), atol=1e-5), "mismatch vs reference"
    print("KERNEL_OK")
</pallas_src>

<mosaic_0001>
module attributes {stable_mosaic.version = 11 : i64} {
  func.func @_features_linear_kernel(%arg0: i32, %arg1: memref<5x256xi32, #tpu.memory_space<vmem>>, %arg2: memref<45x1xf32, #tpu.memory_space<vmem>>, %arg3: memref<1x1xf32, #tpu.memory_space<vmem>>, %arg4: memref<1x256xf32, #tpu.memory_space<vmem>>) attributes {dimension_semantics = [#tpu.dimension_semantics<parallel>], iteration_bounds = array<i64: 2>, scalar_prefetch = 0 : i64, scratch_operands = 0 : i64, tpu.core_type = #tpu.core_type<tc>, window_params = [{transform_indices = @transform_0, window_bounds = array<i64: 5, 256>}, {pipeline_mode = #tpu.pipeline_mode<synchronous>, transform_indices = @transform_1, window_bounds = array<i64: 45, 1>}, {pipeline_mode = #tpu.pipeline_mode<synchronous>, transform_indices = @transform_2, window_bounds = array<i64: 1, 1>}, {transform_indices = @transform_3, window_bounds = array<i64: 1, 256>}]} {
    %c0 = arith.constant 0 : index
    %c0_0 = arith.constant 0 : index
    %0 = vector.load %arg1[%c0, %c0_0] : memref<5x256xi32, #tpu.memory_space<vmem>>, vector<5x256xi32>
    %cst = arith.constant 0.000000e+00 : f32
    %1 = vector.broadcast %cst : f32 to vector<5x256xf32>
    %c0_i32 = arith.constant 0 : i32
    %c45_i32 = arith.constant 45 : i32
    %2 = arith.addi %c0_i32, %c45_i32 : i32
    %c1_i32 = arith.constant 1 : i32
    %3 = scf.for %arg5 = %c0_i32 to %2 step %c1_i32 iter_args(%arg6 = %1) -> (vector<5x256xf32>)  : i32 {
      %10 = arith.index_cast %arg5 : i32 to index
      %c0_7 = arith.constant 0 : index
      %11 = vector.load %arg2[%10, %c0_7] : memref<45x1xf32, #tpu.memory_space<vmem>>, vector<1x1xf32>
      %12 = vector.broadcast %arg5 : i32 to vector<5x256xi32>
      %13 = arith.cmpi eq, %0, %12 : vector<5x256xi32>
      %cst_8 = arith.constant 0.000000e+00 : f32
      %14 = vector.shape_cast %11 : vector<1x1xf32> to vector<1x1xf32>
      %15 = vector.broadcast %14 : vector<1x1xf32> to vector<5x256xf32>
      %16 = vector.broadcast %cst_8 : f32 to vector<5x256xf32>
      %17 = arith.select %13, %15, %16 : vector<5x256xi1>, vector<5x256xf32>
      %18 = arith.addf %arg6, %17 : vector<5x256xf32>
      scf.yield %18 : vector<5x256xf32>
    }
    %c45_i32_1 = arith.constant 45 : i32
    %cst_2 = arith.constant dense<0.000000e+00> : vector<256xf32>
    %4 = vector.multi_reduction <add>, %3, %cst_2 [0] : vector<5x256xf32> to vector<256xf32>
    %5 = vector.shape_cast %4 : vector<256xf32> to vector<1x256xf32>
    %c0_3 = arith.constant 0 : index
    %c0_4 = arith.constant 0 : index
    %6 = vector.load %arg3[%c0_3, %c0_4] : memref<1x1xf32, #tpu.memory_space<vmem>>, vector<1x1xf32>
    %7 = vector.broadcast %6 : vector<1x1xf32> to vector<1x256xf32>
    %8 = arith.addf %5, %7 : vector<1x256xf32>
    %c0_5 = arith.constant 0 : index
    %c0_6 = arith.constant 0 : index
    %9 = vector.load %arg4[%c0_5, %c0_6] : memref<1x256xf32, #tpu.memory_space<vmem>>, vector<1x256xf32>
    tpu.vector_store %arg4[%c0_5, %c0_6], %8 {strides = array<i32>} : memref<1x256xf32, #tpu.memory_space<vmem>>, vector<1x256xf32>,
    return
  }
  func.func @transform_0(%arg0: i32) -> (i32, i32) {
    %c0_i32 = arith.constant 0 : i32
    %c0_i32_0 = arith.constant 0 : i32
    return %c0_i32, %arg0 : i32, i32
  }
  func.func @transform_1(%arg0: i32) -> (i32, i32) {
    %c0_i32 = arith.constant 0 : i32
    %c0_i32_0 = arith.constant 0 : i32
    %c0_i32_1 = arith.constant 0 : i32
    return %c0_i32, %c0_i32_0 : i32, i32
  }
  func.func @transform_2(%arg0: i32) -> (i32, i32) {
    %c0_i32 = arith.constant 0 : i32
    %c0_i32_0 = arith.constant 0 : i32
    %c0_i32_1 = arith.constant 0 : i32
    return %c0_i32, %c0_i32_0 : i32, i32
  }
  func.func @transform_3(%arg0: i32) -> (i32, i32) {
    %c0_i32 = arith.constant 0 : i32
    %c0_i32_0 = arith.constant 0 : i32
    return %c0_i32, %arg0 : i32, i32
  }
}

module attributes {stable_mosaic.version = 11 : i64} {
  func.func @_features_linear_kernel(%arg0: i32, %arg1: memref<5x256xi32, #tpu.memory_space<vmem>>, %arg2: memref<45x1xf32, #tpu.memory_space<vmem>>, %arg3: memref<1x1xf32, #tpu.memory_space<vmem>>, %arg4: memref<1x256xf32, #tpu.memory_space<vmem>>) attributes {dimension_semantics = [#tpu.dimension_semantics<parallel>], iteration_bounds = array<i64: 2>, scalar_prefetch = 0 : i64, scratch_operands = 0 : i64, tpu.core_type = #tpu.core_type<tc>, window_params = [{transform_indices = @transform_0, window_bounds = array<i64: 5, 256>}, {pipeline_mode = #tpu.pipeline_mode<synchronous>, transform_indices = @transform_1, window_bounds = array<i64: 45, 1>}, {pipeline_mode = #tpu.pipeline_mode<synchronous>, transform_indices = @transform_2, window_bounds = array<i64: 1, 1>}, {transform_indices = @transform_3, window_bounds = array<i64: 1, 256>}]} {
    %c0 = arith.constant 0 : index
    %c0_0 = arith.constant 0 : index
    %0 = vector.load %arg1[%c0, %c0_0] : memref<5x256xi32, #tpu.memory_space<vmem>>, vector<5x256xi32>
    %cst = arith.constant 0.000000e+00 : f32
    %1 = vector.broadcast %cst : f32 to vector<5x256xf32>
    %c0_i32 = arith.constant 0 : i32
    %c45_i32 = arith.constant 45 : i32
    %2 = arith.addi %c0_i32, %c45_i32 : i32
    %c1_i32 = arith.constant 1 : i32
    %3 = scf.for %arg5 = %c0_i32 to %2 step %c1_i32 iter_args(%arg6 = %1) -> (vector<5x256xf32>)  : i32 {
      %10 = arith.index_cast %arg5 : i32 to index
      %c0_7 = arith.constant 0 : index
      %11 = vector.load %arg2[%10, %c0_7] : memref<45x1xf32, #tpu.memory_space<vmem>>, vector<1x1xf32>
      %12 = vector.broadcast %arg5 : i32 to vector<5x256xi32>
      %13 = arith.cmpi eq, %0, %12 : vector<5x256xi32>
      %cst_8 = arith.constant 0.000000e+00 : f32
      %14 = vector.shape_cast %11 : vector<1x1xf32> to vector<1x1xf32>
      %15 = vector.broadcast %14 : vector<1x1xf32> to vector<5x256xf32>
      %16 = vector.broadcast %cst_8 : f32 to vector<5x256xf32>
      %17 = arith.select %13, %15, %16 : vector<5x256xi1>, vector<5x256xf32>
      %18 = arith.addf %arg6, %17 : vector<5x256xf32>
      scf.yield %18 : vector<5x256xf32>
    }
    %c45_i32_1 = arith.constant 45 : i32
    %cst_2 = arith.constant dense<0.000000e+00> : vector<256xf32>
    %4 = vector.multi_reduction <add>, %3, %cst_2 [0] : vector<5x256xf32> to vector<256xf32>
    %5 = vector.shape_cast %4 : vector<256xf32> to vector<1x256xf32>
    %c0_3 = arith.constant 0 : index
    %c0_4 = arith.constant 0 : index
    %6 = vector.load %arg3[%c0_3, %c0_4] : memref<1x1xf32, #tpu.memory_space<vmem>>, vector<1x1xf32>
    %7 = vector.broadcast %6 : vector<1x1xf32> to vector<1x256xf32>
    %8 = arith.addf %5, %7 : vector<1x256xf32>
    %c0_5 = arith.constant 0 : index
    %c0_6 = arith.constant 0 : index
    %9 = vector.load %arg4[%c0_5, %c0_6] : memref<1x256xf32, #tpu.memory_space<vmem>>, vector<1x256xf32>
    tpu.vector_store %arg4[%c0_5, %c0_6], %8 {strides = array<i32>} : memref<1x256xf32, #tpu.memory_space<vmem>>, vector<1x256xf32>,
    return
  }
  func.func @transform_0(%arg0: i32) -> (i32, i32) {
    %c0_i32 = arith.constant 0 : i32
    %c0_i32_0 = arith.constant 0 : i32
    return %c0_i32, %arg0 : i32, i32
  }
  func.func @transform_1(%arg0: i32) -> (i32, i32) {
    %c0_i32 = arith.constant 0 : i32
    %c0_i32_0 = arith.constant 0 : i32
    %c0_i32_1 = arith.constant 0 : i32
    return %c0_i32, %c0_i32_0 : i32, i32
  }
  func.func @transform_2(%arg0: i32) -> (i32, i32) {
    %c0_i32 = arith.constant 0 : i32
    %c0_i32_0 = arith.constant 0 : i32
    %c0_i32_1 = arith.constant 0 : i32
    return %c0_i32, %c0_i32_0 : i32, i32
  }
  func.func @transform_3(%arg0: i32) -> (i32, i32) {
    %c0_i32 = arith.constant 0 : i32
    %c0_i32_0 = arith.constant 0 : i32
    return %c0_i32, %arg0 : i32, i32
  }
}

</mosaic_0001>

<llo_original>
// kernel: tpu_custom_call.1
$region0: #{tpu_custom_call.1}
  #allocation0 [shape = 'u32[]', space=smem, size = 0x4, offset = 0x4, fixed_abs, tag = 'smem constant byte address 0x4 - core index']
  #allocation1 [shape = 'u32[72,128]{1,0:T(1,128)}', space=vmem, size = 0x9000, scoped, tag = 'internal scratch']
  #allocation2 [shape = 'f32[1,1]{1,0:T(1,128)S(1)}', space=vmem, size = 0x200, scoped, tag = 'scoped memory for tpu_custom_call.1']
  %s0 = inlined_call_operand.vmem [shape: s32[5,512], index: 0, kind: input, shape index: {}]
  %s1 = inlined_call_operand.vmem [shape: f32[45,1], index: 1, kind: input, shape index: {}]
  %s2 = inlined_call_operand.<no memory space> [shape: f32[1,1], index: 2, kind: input, shape index: {}]
  %s3 = inlined_call_operand.hbm [shape: f32[1,512], index: 3, kind: output, shape index: {}]
  %s4 = sld [smem:[#allocation0]]
  $region52: #{tpu_custom_call.1} parent=0
    _
  %s6 = ssub.s32 1, %s4
  %s7 = scalar_select 0, %s6, %s4
  %v8 = vstv %s2
  %9 = vst [vmem:[#allocation2] sm:$0x1] %v8
  $region1: #{tpu_custom_call.1} parent=0
    #allocation3 [shape = 'u8[2048]{0}', space=vmem, size = 0x800, scoped, tag = 'output window, operand 0']
    #allocation4 [shape = 's32[2]{0}', space=sflag, size = 0x8, scoped, tag = 'scoped memory for tpu_custom_call.1']
    %10 = vsyncpa [#allocation4], 0
    %s11 = scalar_lea.sflag [#allocation4], 1
    %12 = vsyncpa %s11, 0
    loop: start=0, step=1, limit=4
    $region2: #{tpu_custom_call.1} parent=1 // loop_pre_header
      _
    $region3: #{tpu_custom_call.1} parent=1 // loop_header
      %s14 = sphi 0, %s18
      %p15 = scmp.ge.s32.totalorder %s14, 4
      %s24 = sphi 0, %s26
      %s27 = sphi 0, %s24
      %s28 = sphi 0, %s27
      %s44 = sphi 0, %s28
      %s48 = sphi 0, %s48
      %s50 = sphi 0, %s48
      %s51 = sphi 0, %s50
      %s65 = sphi 0, %s51
      %s69 = sphi 0, %s69
      %s71 = sphi 0, %s69
      %s72 = sphi 0, %s71
      %s86 = sphi 0, %s72
      %s92 = sphi 0, %s94
      %s95 = sphi 0, %s92
      %s96 = sphi 0, %s95
      %s112 = sphi 0, %s96
    $region4: #{tpu_custom_call.1} parent=1 // loop_header_branch
      %17 = sbr.rel (%p15) target = $region8
    $region5: #{tpu_custom_call.1} parent=1 // loop_body
      %s19 = ssub.s32 %s14, 1
      %s20 = ssub.s32 %s14, 2
      %s21 = sadd.s32 %s14, 1
      %s22 = ssub.s32 %s14, %s21
      %p23 = scmp.eq.s32.totalorder %s22, 0
      %s25 = sadd.s32 %s24, 1
      %s26 = scalar_select %p23, %s24, %s25
      %p29 = pneg %p23
      %p30 = scmp.eq.s32.totalorder %s14, 1
      %p31 = por %p29, %p30
      %p32 = scmp.ne.s32.totalorder %s24, %s27
      %p33 = scmp.eq.s32.totalorder %s14, 0
      %p34 = por %p32, %p33
      %p35 = scmp.ne.s32.totalorder %s24, %s27
      %p36 = scmp.eq.s32.totalorder %s19, 1
      %p37 = por %p35, %p36
      %p38 = scmp.ne.s32.totalorder %s27, %s28
      %p39 = scmp.eq.s32.totalorder %s19, 0
      %p40 = por %p38, %p39
      %p41 = scmp.ne.s32.totalorder %s27, %s28
      %p42 = scmp.eq.s32.totalorder %s20, 1
      %p43 = por %p41, %p42
      %p45 = scmp.ne.s32.totalorder %s28, %s44
      %p46 = scmp.eq.s32.totalorder %s20, 0
      %p47 = por %p45, %p46
      %s49 = sadd.s32 %s48, 1
      %p52 = scmp.eq.s32.totalorder %s14, 1
      %p53 = scmp.ne.s32.totalorder %s48, %s50
      %p54 = scmp.eq.s32.totalorder %s14, 0
      %p55 = por %p53, %p54
      %p56 = scmp.ne.s32.totalorder %s48, %s50
      %p57 = scmp.eq.s32.totalorder %s19, 1
      %p58 = por %p56, %p57
      %p59 = scmp.ne.s32.totalorder %s50, %s51
      %p60 = scmp.eq.s32.totalorder %s19, 0
      %p61 = por %p59, %p60
      %p62 = scmp.ne.s32.totalorder %s50, %s51
      %p63 = scmp.eq.s32.totalorder %s20, 1
      %p64 = por %p62, %p63
      %p66 = scmp.ne.s32.totalorder %s51, %s65
      %p67 = scmp.eq.s32.totalorder %s20, 0
      %p68 = por %p66, %p67
      %s70 = sadd.s32 %s69, 1
      %p73 = scmp.eq.s32.totalorder %s14, 1
      %p74 = scmp.ne.s32.totalorder %s69, %s71
      %p75 = scmp.eq.s32.totalorder %s14, 0
      %p76 = por %p74, %p75
      %p77 = scmp.ne.s32.totalorder %s69, %s71
      %p78 = scmp.eq.s32.totalorder %s19, 1
      %p79 = por %p77, %p78
      %p80 = scmp.ne.s32.totalorder %s71, %s72
      %p81 = scmp.eq.s32.totalorder %s19, 0
      %p82 = por %p80, %p81
      %p83 = scmp.ne.s32.totalorder %s71, %s72
      %p84 = scmp.eq.s32.totalorder %s20, 1
      %p85 = por %p83, %p84
      %p87 = scmp.ne.s32.totalorder %s72, %s86
      %p88 = scmp.eq.s32.totalorder %s20, 0
      %p89 = por %p87, %p88
      %s90 = ssub.s32 %s14, %s21
      %p91 = scmp.eq.s32.totalorder %s90, 0
      %s93 = sadd.s32 %s92, 1
      %s94 = scalar_select %p91, %s92, %s93
      %p97 = pneg %p91
      %p98 = scmp.eq.s32.totalorder %s14, 1
      %p99 = por %p97, %p98
      %p100 = scmp.ne.s32.totalorder %s92, %s95
      %p101 = scmp.eq.s32.totalorder %s14, 0
      %p102 = por %p100, %p101
      %p103 = scmp.ne.s32.totalorder %s92, %s95
      %p104 = scmp.eq.s32.totalorder %s19, 1
      %p105 = por %p103, %p104
      %p106 = scmp.ne.s32.totalorder %s95, %s96
      %p107 = scmp.eq.s32.totalorder %s19, 0
      %p108 = por %p106, %p107
      %p109 = scmp.ne.s32.totalorder %s95, %s96
      %p110 = scmp.eq.s32.totalorder %s20, 1
      %p111 = por %p109, %p110
      %p113 = scmp.ne.s32.totalorder %s96, %s112
      %p114 = scmp.eq.s32.totalorder %s20, 0
      %p115 = por %p113, %p114
      %p116 = scmp.le.s32.totalorder 1, %s14
      %p117 = scmp.lt.s32.totalorder %s14, 3
      %p118 = pnand %p116, %p117
      %p119 = pneg %p118
      // Predicated region
      $region9: #{tpu_custom_call.1} parent=5 // pred_check
        _
      $region10: #{tpu_custom_call.1} parent=5 // pred_check_branch
        %121 = sbr.rel (%p118) target = $region12
      $region11: #{tpu_custom_call.1} parent=5 // pred_region
        %s122 = ssub.s32 %s14, 1
        // Predicated region
        $region13: #{tpu_custom_call.1} parent=11 // pred_check
          %p123 = pneg %p61
        $region14: #{tpu_custom_call.1} parent=11 // pred_check_branch
          %125 = sbr.rel (%p123) target = $region16
        $region15: #{tpu_custom_call.1} parent=11 // pred_region
          _
        $region16: #{tpu_custom_call.1} parent=11 // pred_fallthru
          _
        // Predicated region
        $region17: #{tpu_custom_call.1} parent=11 // pred_check
          %p126 = pneg %p82
        $region18: #{tpu_custom_call.1} parent=11 // pred_check_branch
          %128 = sbr.rel (%p126) target = $region20
        $region19: #{tpu_custom_call.1} parent=11 // pred_region
          _
        $region20: #{tpu_custom_call.1} parent=11 // pred_fallthru
          _
      $region12: #{tpu_custom_call.1} parent=5 // pred_fallthru
        _
      %p129 = scmp.lt.s32.totalorder %s14, 2
      // Predicated region
      $region21: #{tpu_custom_call.1} parent=5 // pred_check
        %p130 = pneg %p129
      $region22: #{tpu_custom_call.1} parent=5 // pred_check_branch
        %132 = sbr.rel (%p130) target = $region24
      $region23: #{tpu_custom_call.1} parent=5 // pred_region
        // Predicated region
        $region25: #{tpu_custom_call.1} parent=23 // pred_check
          %p133 = pneg %p34
        $region26: #{tpu_custom_call.1} parent=23 // pred_check_branch
          %135 = sbr.rel (%p133) target = $region28
        $region27: #{tpu_custom_call.1} parent=23 // pred_region
          %s136 = smul.u32 2, %s14
          %p137 = scmp.lt.s32.totalorder %s136, 3
          %s138 = scalar_select %p137, %s136, 3
          %s139 = smul.addr %s138, 8
          %s140 = scalar_lea.vmem %s0, %s139
          %s141 = smul.u32 2, %s14
        $region28: #{tpu_custom_call.1} parent=23 // pred_fallthru
          _
      $region24: #{tpu_custom_call.1} parent=5 // pred_fallthru
        _
      %p142 = scmp.le.s32.totalorder 1, %s14
      %p143 = scmp.lt.s32.totalorder %s14, 3
      %p144 = pnand %p142, %p143
      %p145 = pneg %p144
      // Predicated region
      $region29: #{tpu_custom_call.1} parent=5 // pred_check
        _
      $region30: #{tpu_custom_call.1} parent=5 // pred_check_branch
        %147 = sbr.rel (%p144) target = $region32
      $region31: #{tpu_custom_call.1} parent=5 // pred_region
        %s148 = ssub.s32 %s14, 1
        %s149 = smul.u32 2, %s19
        %p150 = scmp.lt.s32.totalorder %s149, 3
        %s151 = scalar_select %p150, %s149, 3
        %s152 = smul.addr %s151, 8
        %s153 = scalar_lea.vmem %s0, %s152
        %p154 = pneg %p40
        %p155 = pneg %p37
        %p156 = pneg %p61
        %p157 = pneg %p58
        %p158 = pneg %p82
        %p159 = pneg %p79
        %p160 = pneg %p108
        %p161 = pneg %p105
        %s162 = sand.u32 %s95, 1
        %s163 = scalar_lea.sflag [#allocation4], %s162
        %s164 = sand.u32 %s95, 1
        %s165 = smul.addr %s164, 2
        %s166 = scalar_lea.vmem [#allocation3], %s165
        %s167 = smul.u32 2, %s19
        %p168 = scmp.lt.s32.totalorder %s167, 3
        %s169 = scalar_select %p168, %s167, 3
        %s170 = smul.addr %s169, 8
        %s171 = scalar_lea.vmem %s0, %s170
        %s172 = smul.u32 2, %s19
        %s173 = smul.u32 2, %s19
        %v174 = vld [vmem:[%s171] sm:$0x1f]
        %v175 = vld [vmem:[%s171 + $0x8] sm:$0x1f]
        loop: start=0, step=1, limit=45
        $region33: #{tpu_custom_call.1} parent=31 // loop_pre_header
          _
        $region34: #{tpu_custom_call.1} parent=31 // loop_header
          %s177 = sphi 0, %s181
          %p178 = scmp.ge.s32.totalorder %s177, 45
          %v182 = vphi 0.0, %v195
          %v183 = vphi 0.0, %v196
        $region35: #{tpu_custom_call.1} parent=31 // loop_header_branch
          %180 = sbr.rel (%p178) target = $region39
        $region36: #{tpu_custom_call.1} parent=31 // loop_body
          %s184 = scalar_lea.vmem %s1, %s177
          %v185 = vld [vmem:[%s184] sm:$0x1]
          %v186 = vstv %s177
          %vm187 = vcmp.eq.s32.totalorder %v174, %v186
          %vm188 = vcmp.eq.s32.totalorder %v175, %v186
          %s190 = vtos %v185
          %v191 = vstv %s190
          %v193 = vsel %vm187, %v191, 0.0
          %v194 = vsel %vm188, %v191, 0.0
          %v195 = vadd.f32 %v182, %v193
          %v196 = vadd.f32 %v183, %v194
        $region37: #{tpu_custom_call.1} parent=31 // loop_footer
          %s181 = sadd.s32 1, %s177
        $region38: #{tpu_custom_call.1} parent=31 // loop_footer_branch
          %176 = sbr.rel target = $region34
        $region39: #{tpu_custom_call.1} parent=31 // loop_exit
          _
        %vm197 = vcmask 1044480
        %v198 = vsel %vm197, %v182, 0.0
        %v199 = vrot.slane %v198, 4
        %v200 = vadd.f32 %v198, %v199
        %v201 = vrot.slane %v200, 2
        %v202 = vadd.f32 %v200, %v201
        %v203 = vrot.slane %v202, 1
        %v204 = vadd.f32 %v202, %v203
        %v205 = vsel %vm197, %v183, 0.0
        %v206 = vrot.slane %v205, 4
        %v207 = vadd.f32 %v205, %v206
        %v208 = vrot.slane %v207, 2
        %v209 = vadd.f32 %v207, %v208
        %v210 = vrot.slane %v209, 1
        %v211 = vadd.f32 %v209, %v210
        %v212 = vld [vmem:[#allocation2] sm:$0x1]
        %214 = vset.pattern.permute.xlu0 0
        %215 = vperm.xlu0 %214, %v212
        %v216 = vpop.permute.xlu0 %215
        %v218 = vperm.slane %v216, 0
        %v219 = vadd.f32 %v204, %v218
        %v220 = vadd.f32 %v211, %v218
        %v223 = vrot.slane %v220, 7
        %vm224 = vcmask 1040384
        %v225 = vsel %vm224, %v219, %v223
        %v227 = vlaneseq
        %vm228 = vcmp.ge.s32.totalorder %v227, 0
        %vm229 = vcmp.lt.s32.totalorder %v227, 256
        %vm230 = vmand %vm228, %vm229
        %231 = vst.msk [vmem:[%s166] sm:$0x3] %vm230, %v225
        %s232 = sand.u32 %s95, 1
        %s233 = scalar_lea.sflag [#allocation4], %s232
        %s234 = sand.u32 %s95, 1
        %s235 = smul.addr %s234, 2
        %s236 = scalar_lea.vmem [#allocation3], %s235
        // Predicated region
        $region40: #{tpu_custom_call.1} parent=31 // pred_check
          %p237 = pneg %p105
        $region41: #{tpu_custom_call.1} parent=31 // pred_check_branch
          %239 = sbr.rel (%p237) target = $region43
        $region42: #{tpu_custom_call.1} parent=31 // pred_region
          %s240 = smul.u32 2, %s19
          %242 = vsyncadd %s233, 0
          %s243 = scalar_lea.hbm %s3, %s240
          %s245 = sshll.u32 %s236, 4
          %s246 = int_to_ptr.vmem [resolvable:$true] %s245
          %s247 = sshll.u32 %s243, 4
          %s248 = int_to_ptr.hbm [resolvable:$true] %s247
          %250 = dma.vmem_to_hbm [thread:$0]  %s246, 32, %s248, %s233
        $region43: #{tpu_custom_call.1} parent=31 // pred_fallthru
          _
      $region32: #{tpu_custom_call.1} parent=5 // pred_fallthru
        _
      %p251 = scmp.le.s32.totalorder 2, %s14
      // Predicated region
      $region44: #{tpu_custom_call.1} parent=5 // pred_check
        %p252 = pneg %p251
      $region45: #{tpu_custom_call.1} parent=5 // pred_check_branch
        %254 = sbr.rel (%p252) target = $region47
      $region46: #{tpu_custom_call.1} parent=5 // pred_region
        %s255 = ssub.s32 %s14, 2
        // Predicated region
        $region48: #{tpu_custom_call.1} parent=46 // pred_check
          %p256 = pneg %p111
        $region49: #{tpu_custom_call.1} parent=46 // pred_check_branch
          %258 = sbr.rel (%p256) target = $region51
        $region50: #{tpu_custom_call.1} parent=46 // pred_region
          %s259 = sand.u32 %s96, 1
          %s260 = scalar_lea.sflag [#allocation4], %s259
          %s261 = sand.u32 %s96, 1
          %s262 = smul.addr %s261, 2
          %s263 = scalar_lea.vmem [#allocation3], %s262
          %265 = dma.done %s260, 32
        $region51: #{tpu_custom_call.1} parent=46 // pred_fallthru
          _
      $region47: #{tpu_custom_call.1} parent=5 // pred_fallthru
        _
    $region6: #{tpu_custom_call.1} parent=1 // loop_footer
      %s18 = sadd.s32 1, %s14
    $region7: #{tpu_custom_call.1} parent=1 // loop_footer_branch
      %13 = sbr.rel target = $region3
    $region8: #{tpu_custom_call.1} parent=1 // loop_exit
      _
    %266 = vsyncpa [#allocation4], 1
    %s267 = scalar_lea.sflag [#allocation4], 1
    %268 = vsyncpa %s267, 1

// kernel: tpu_custom_call.1
$region0: #{tpu_custom_call.1}
  #allocation0 [shape = 'u32[]', space=smem, size = 0x4, offset = 0x4, fixed_abs, tag = 'smem constant byte address 0x4 - core index']
  #allocation1 [shape = 'u32[72,128]{1,0:T(1,128)}', space=vmem, size = 0x9000, scoped, tag = 'internal scratch']
  #allocation2 [shape = 'f32[1,1]{1,0:T(1,128)S(1)}', space=vmem, size = 0x200, scoped, tag = 'scoped memory for tpu_custom_call.1']
  %s0 = inlined_call_operand.vmem [shape: s32[5,512], index: 0, kind: input, shape index: {}]
  %s1 = inlined_call_operand.vmem [shape: f32[45,1], index: 1, kind: input, shape index: {}]
  %s2 = inlined_call_operand.<no memory space> [shape: f32[1,1], index: 2, kind: input, shape index: {}]
  %s3 = inlined_call_operand.hbm [shape: f32[1,512], index: 3, kind: output, shape index: {}]
  %s4 = sld [smem:[#allocation0]]
  $region52: #{tpu_custom_call.1} parent=0
    _
  %s6 = ssub.s32 1, %s4
  %s7 = scalar_select 0, %s6, %s4
  %v8 = vstv %s2
  %9 = vst [vmem:[#allocation2] sm:$0x1] %v8
  $region1: #{tpu_custom_call.1} parent=0
    #allocation3 [shape = 'u8[2048]{0}', space=vmem, size = 0x800, scoped, tag = 'output window, operand 0']
    #allocation4 [shape = 's32[2]{0}', space=sflag, size = 0x8, scoped, tag = 'scoped memory for tpu_custom_call.1']
    %10 = vsyncpa [#allocation4], 0
    %s11 = scalar_lea.sflag [#allocation4], 1
    %12 = vsyncpa %s11, 0
    loop: start=0, step=1, limit=4
    $region2: #{tpu_custom_call.1} parent=1 // loop_pre_header
      _
    $region3: #{tpu_custom_call.1} parent=1 // loop_header
      %s14 = sphi 0, %s18
      %p15 = scmp.ge.s32.totalorder %s14, 4
      %s24 = sphi 0, %s26
      %s27 = sphi 0, %s24
      %s28 = sphi 0, %s27
      %s44 = sphi 0, %s28
      %s48 = sphi 0, %s48
      %s50 = sphi 0, %s48
      %s51 = sphi 0, %s50
      %s65 = sphi 0, %s51
      %s69 = sphi 0, %s69
      %s71 = sphi 0, %s69
      %s72 = sphi 0, %s71
      %s86 = sphi 0, %s72
      %s92 = sphi 0, %s94
      %s95 = sphi 0, %s92
      %s96 = sphi 0, %s95
      %s112 = sphi 0, %s96
    $region4: #{tpu_custom_call.1} parent=1 // loop_header_branch
      %17 = sbr.rel (%p15) target = $region8
    $region5: #{tpu_custom_call.1} parent=1 // loop_body
      %s19 = ssub.s32 %s14, 1
      %s20 = ssub.s32 %s14, 2
      %s21 = sadd.s32 %s14, 1
      %s22 = ssub.s32 %s14, %s21
      %p23 = scmp.eq.s32.totalorder %s22, 0
      %s25 = sadd.s32 %s24, 1
      %s26 = scalar_select %p23, %s24, %s25
      %p29 = pneg %p23
      %p30 = scmp.eq.s32.totalorder %s14, 1
      %p31 = por %p29, %p30
      %p32 = scmp.ne.s32.totalorder %s24, %s27
      %p33 = scmp.eq.s32.totalorder %s14, 0
      %p34 = por %p32, %p33
      %p35 = scmp.ne.s32.totalorder %s24, %s27
      %p36 = scmp.eq.s32.totalorder %s19, 1
      %p37 = por %p35, %p36
      %p38 = scmp.ne.s32.totalorder %s27, %s28
      %p39 = scmp.eq.s32.totalorder %s19, 0
      %p40 = por %p38, %p39
      %p41 = scmp.ne.s32.totalorder %s27, %s28
      %p42 = scmp.eq.s32.totalorder %s20, 1
      %p43 = por %p41, %p42
      %p45 = scmp.ne.s32.totalorder %s28, %s44
      %p46 = scmp.eq.s32.totalorder %s20, 0
      %p47 = por %p45, %p46
      %s49 = sadd.s32 %s48, 1
      %p52 = scmp.eq.s32.totalorder %s14, 1
      %p53 = scmp.ne.s32.totalorder %s48, %s50
      %p54 = scmp.eq.s32.totalorder %s14, 0
      %p55 = por %p53, %p54
      %p56 = scmp.ne.s32.totalorder %s48, %s50
      %p57 = scmp.eq.s32.totalorder %s19, 1
      %p58 = por %p56, %p57
      %p59 = scmp.ne.s32.totalorder %s50, %s51
      %p60 = scmp.eq.s32.totalorder %s19, 0
      %p61 = por %p59, %p60
      %p62 = scmp.ne.s32.totalorder %s50, %s51
      %p63 = scmp.eq.s32.totalorder %s20, 1
      %p64 = por %p62, %p63
      %p66 = scmp.ne.s32.totalorder %s51, %s65
      %p67 = scmp.eq.s32.totalorder %s20, 0
      %p68 = por %p66, %p67
      %s70 = sadd.s32 %s69, 1
      %p73 = scmp.eq.s32.totalorder %s14, 1
      %p74 = scmp.ne.s32.totalorder %s69, %s71
      %p75 = scmp.eq.s32.totalorder %s14, 0
      %p76 = por %p74, %p75
      %p77 = scmp.ne.s32.totalorder %s69, %s71
      %p78 = scmp.eq.s32.totalorder %s19, 1
      %p79 = por %p77, %p78
      %p80 = scmp.ne.s32.totalorder %s71, %s72
      %p81 = scmp.eq.s32.totalorder %s19, 0
      %p82 = por %p80, %p81
      %p83 = scmp.ne.s32.totalorder %s71, %s72
      %p84 = scmp.eq.s32.totalorder %s20, 1
      %p85 = por %p83, %p84
      %p87 = scmp.ne.s32.totalorder %s72, %s86
      %p88 = scmp.eq.s32.totalorder %s20, 0
      %p89 = por %p87, %p88
      %s90 = ssub.s32 %s14, %s21
      %p91 = scmp.eq.s32.totalorder %s90, 0
      %s93 = sadd.s32 %s92, 1
      %s94 = scalar_select %p91, %s92, %s93
      %p97 = pneg %p91
      %p98 = scmp.eq.s32.totalorder %s14, 1
      %p99 = por %p97, %p98
      %p100 = scmp.ne.s32.totalorder %s92, %s95
      %p101 = scmp.eq.s32.totalorder %s14, 0
      %p102 = por %p100, %p101
      %p103 = scmp.ne.s32.totalorder %s92, %s95
      %p104 = scmp.eq.s32.totalorder %s19, 1
      %p105 = por %p103, %p104
      %p106 = scmp.ne.s32.totalorder %s95, %s96
      %p107 = scmp.eq.s32.totalorder %s19, 0
      %p108 = por %p106, %p107
      %p109 = scmp.ne.s32.totalorder %s95, %s96
      %p110 = scmp.eq.s32.totalorder %s20, 1
      %p111 = por %p109, %p110
      %p113 = scmp.ne.s32.totalorder %s96, %s112
      %p114 = scmp.eq.s32.totalorder %s20, 0
      %p115 = por %p113, %p114
      %p116 = scmp.le.s32.totalorder 1, %s14
      %p117 = scmp.lt.s32.totalorder %s14, 3
      %p118 = pnand %p116, %p117
      %p119 = pneg %p118
      // Predicated region
      $region9: #{tpu_custom_call.1} parent=5 // pred_check
        _
      $region10: #{tpu_custom_call.1} parent=5 // pred_check_branch
        %121 = sbr.rel (%p118) target = $region12
      $region11: #{tpu_custom_call.1} parent=5 // pred_region
        %s122 = ssub.s32 %s14, 1
        // Predicated region
        $region13: #{tpu_custom_call.1} parent=11 // pred_check
          %p123 = pneg %p61
        $region14: #{tpu_custom_call.1} parent=11 // pred_check_branch
          %125 = sbr.rel (%p123) target = $region16
        $region15: #{tpu_custom_call.1} parent=11 // pred_region
          _
        $region16: #{tpu_custom_call.1} parent=11 // pred_fallthru
          _
        // Predicated region
        $region17: #{tpu_custom_call.1} parent=11 // pred_check
          %p126 = pneg %p82
        $region18: #{tpu_custom_call.1} parent=11 // pred_check_branch
          %128 = sbr.rel (%p126) target = $region20
        $region19: #{tpu_custom_call.1} parent=11 // pred_region
          _
        $region20: #{tpu_custom_call.1} parent=11 // pred_fallthru
          _
      $region12: #{tpu_custom_call.1} parent=5 // pred_fallthru
        _
      %p129 = scmp.lt.s32.totalorder %s14, 2
      // Predicated region
      $region21: #{tpu_custom_call.1} parent=5 // pred_check
        %p130 = pneg %p129
      $region22: #{tpu_custom_call.1} parent=5 // pred_check_branch
        %132 = sbr.rel (%p130) target = $region24
      $region23: #{tpu_custom_call.1} parent=5 // pred_region
        // Predicated region
        $region25: #{tpu_custom_call.1} parent=23 // pred_check
          %p133 = pneg %p34
        $region26: #{tpu_custom_call.1} parent=23 // pred_check_branch
          %135 = sbr.rel (%p133) target = $region28
        $region27: #{tpu_custom_call.1} parent=23 // pred_region
          %s136 = smul.u32 2, %s14
          %p137 = scmp.lt.s32.totalorder %s136, 3
          %s138 = scalar_select %p137, %s136, 3
          %s139 = smul.addr %s138, 8
          %s140 = scalar_lea.vmem %s0, %s139
          %s141 = smul.u32 2, %s14
        $region28: #{tpu_custom_call.1} parent=23 // pred_fallthru
          _
      $region24: #{tpu_custom_call.1} parent=5 // pred_fallthru
        _
      %p142 = scmp.le.s32.totalorder 1, %s14
      %p143 = scmp.lt.s32.totalorder %s14, 3
      %p144 = pnand %p142, %p143
      %p145 = pneg %p144
      // Predicated region
      $region29: #{tpu_custom_call.1} parent=5 // pred_check
        _
      $region30: #{tpu_custom_call.1} parent=5 // pred_check_branch
        %147 = sbr.rel (%p144) target = $region32
      $region31: #{tpu_custom_call.1} parent=5 // pred_region
        %s148 = ssub.s32 %s14, 1
        %s149 = smul.u32 2, %s19
        %p150 = scmp.lt.s32.totalorder %s149, 3
        %s151 = scalar_select %p150, %s149, 3
        %s152 = smul.addr %s151, 8
        %s153 = scalar_lea.vmem %s0, %s152
        %p154 = pneg %p40
        %p155 = pneg %p37
        %p156 = pneg %p61
        %p157 = pneg %p58
        %p158 = pneg %p82
        %p159 = pneg %p79
        %p160 = pneg %p108
        %p161 = pneg %p105
        %s162 = sand.u32 %s95, 1
        %s163 = scalar_lea.sflag [#allocation4], %s162
        %s164 = sand.u32 %s95, 1
        %s165 = smul.addr %s164, 2
        %s166 = scalar_lea.vmem [#allocation3], %s165
        %s167 = smul.u32 2, %s19
        %p168 = scmp.lt.s32.totalorder %s167, 3
        %s169 = scalar_select %p168, %s167, 3
        %s170 = smul.addr %s169, 8
        %s171 = scalar_lea.vmem %s0, %s170
        %s172 = smul.u32 2, %s19
        %s173 = smul.u32 2, %s19
        %v174 = vld [vmem:[%s171] sm:$0x1f]
        %v175 = vld [vmem:[%s171 + $0x8] sm:$0x1f]
        loop: start=0, step=1, limit=45
        $region33: #{tpu_custom_call.1} parent=31 // loop_pre_header
          _
        $region34: #{tpu_custom_call.1} parent=31 // loop_header
          %s177 = sphi 0, %s181
          %p178 = scmp.ge.s32.totalorder %s177, 45
          %v182 = vphi 0.0, %v195
          %v183 = vphi 0.0, %v196
        $region35: #{tpu_custom_call.1} parent=31 // loop_header_branch
          %180 = sbr.rel (%p178) target = $region39
        $region36: #{tpu_custom_call.1} parent=31 // loop_body
          %s184 = scalar_lea.vmem %s1, %s177
          %v185 = vld [vmem:[%s184] sm:$0x1]
          %v186 = vstv %s177
          %vm187 = vcmp.eq.s32.totalorder %v174, %v186
          %vm188 = vcmp.eq.s32.totalorder %v175, %v186
          %s190 = vtos %v185
          %v191 = vstv %s190
          %v193 = vsel %vm187, %v191, 0.0
          %v194 = vsel %vm188, %v191, 0.0
          %v195 = vadd.f32 %v182, %v193
          %v196 = vadd.f32 %v183, %v194
        $region37: #{tpu_custom_call.1} parent=31 // loop_footer
          %s181 = sadd.s32 1, %s177
        $region38: #{tpu_custom_call.1} parent=31 // loop_footer_branch
          %176 = sbr.rel target = $region34
        $region39: #{tpu_custom_call.1} parent=31 // loop_exit
          _
        %vm197 = vcmask 1044480
        %v198 = vsel %vm197, %v182, 0.0
        %v199 = vrot.slane %v198, 4
        %v200 = vadd.f32 %v198, %v199
        %v201 = vrot.slane %v200, 2
        %v202 = vadd.f32 %v200, %v201
        %v203 = vrot.slane %v202, 1
        %v204 = vadd.f32 %v202, %v203
        %v205 = vsel %vm197, %v183, 0.0
        %v206 = vrot.slane %v205, 4
        %v207 = vadd.f32 %v205, %v206
        %v208 = vrot.slane %v207, 2
        %v209 = vadd.f32 %v207, %v208
        %v210 = vrot.slane %v209, 1
        %v211 = vadd.f32 %v209, %v210
        %v212 = vld [vmem:[#allocation2] sm:$0x1]
        %214 = vset.pattern.permute.xlu0 0
        %215 = vperm.xlu0 %214, %v212
        %v216 = vpop.permute.xlu0 %215
        %v218 = vperm.slane %v216, 0
        %v219 = vadd.f32 %v204, %v218
        %v220 = vadd.f32 %v211, %v218
        %v223 = vrot.slane %v220, 7
        %vm224 = vcmask 1040384
        %v225 = vsel %vm224, %v219, %v223
        %v227 = vlaneseq
        %vm228 = vcmp.ge.s32.totalorder %v227, 0
        %vm229 = vcmp.lt.s32.totalorder %v227, 256
        %vm230 = vmand %vm228, %vm229
        %231 = vst.msk [vmem:[%s166] sm:$0x3] %vm230, %v225
        %s232 = sand.u32 %s95, 1
        %s233 = scalar_lea.sflag [#allocation4], %s232
        %s234 = sand.u32 %s95, 1
        %s235 = smul.addr %s234, 2
        %s236 = scalar_lea.vmem [#allocation3], %s235
        // Predicated region
        $region40: #{tpu_custom_call.1} parent=31 // pred_check
          %p237 = pneg %p105
        $region41: #{tpu_custom_call.1} parent=31 // pred_check_branch
          %239 = sbr.rel (%p237) target = $region43
        $region42: #{tpu_custom_call.1} parent=31 // pred_region
          %s240 = smul.u32 2, %s19
          %242 = vsyncadd %s233, 0
          %s243 = scalar_lea.hbm %s3, %s240
          %s245 = sshll.u32 %s236, 4
          %s246 = int_to_ptr.vmem [resolvable:$true] %s245
          %s247 = sshll.u32 %s243, 4
          %s248 = int_to_ptr.hbm [resolvable:$true] %s247
          %250 = dma.vmem_to_hbm [thread:$0]  %s246, 32, %s248, %s233
        $region43: #{tpu_custom_call.1} parent=31 // pred_fallthru
          _
      $region32: #{tpu_custom_call.1} parent=5 // pred_fallthru
        _
      %p251 = scmp.le.s32.totalorder 2, %s14
      // Predicated region
      $region44: #{tpu_custom_call.1} parent=5 // pred_check
        %p252 = pneg %p251
      $region45: #{tpu_custom_call.1} parent=5 // pred_check_branch
        %254 = sbr.rel (%p252) target = $region47
      $region46: #{tpu_custom_call.1} parent=5 // pred_region
        %s255 = ssub.s32 %s14, 2
        // Predicated region
        $region48: #{tpu_custom_call.1} parent=46 // pred_check
          %p256 = pneg %p111
        $region49: #{tpu_custom_call.1} parent=46 // pred_check_branch
          %258 = sbr.rel (%p256) target = $region51
        $region50: #{tpu_custom_call.1} parent=46 // pred_region
          %s259 = sand.u32 %s96, 1
          %s260 = scalar_lea.sflag [#allocation4], %s259
          %s261 = sand.u32 %s96, 1
          %s262 = smul.addr %s261, 2
          %s263 = scalar_lea.vmem [#allocation3], %s262
          %265 = dma.done %s260, 32
        $region51: #{tpu_custom_call.1} parent=46 // pred_fallthru
          _
      $region47: #{tpu_custom_call.1} parent=5 // pred_fallthru
        _
    $region6: #{tpu_custom_call.1} parent=1 // loop_footer
      %s18 = sadd.s32 1, %s14
    $region7: #{tpu_custom_call.1} parent=1 // loop_footer_branch
      %13 = sbr.rel target = $region3
    $region8: #{tpu_custom_call.1} parent=1 // loop_exit
      _
    %266 = vsyncpa [#allocation4], 1
    %s267 = scalar_lea.sflag [#allocation4], 1
    %268 = vsyncpa %s267, 1

</llo_original>
